<compile_context>
chip_gen: v7x
topology: tpu7x:2x2x1
jax: 0.10.0
libtpu: 0.0.40
codegen_flags: <defaults>
</compile_context>

<pallas_src>
import functools

import jax
import jax.numpy as jnp
import numpy as np
from jax.experimental import pallas as pl
from jax.experimental.pallas import tpu as pltpu


def _gru_block_kernel(x_ref,                       # (T_BLK, B, I)
                      w_i_ref,                     # (I, 3H)  [r | z | n]
                      w_h_ref,                     # (H, 3H)  [r | z | n]
                      b_i_ref,                     # (1, 3H)  (b_ir+b_hr, b_iz+b_hz, b_in)
                      b_hn_ref,                    # (1, H)
                      w_out_ref,                   # (H, O)
                      b_out_ref,                   # (1, O)
                      out_ref,                     # (T_BLK, B, O)
                      h_ref,                       # VMEM (B, H)  carried hidden state
                      hs_ref,                      # VMEM (T_BLK*B, H) hidden-state slab
                      *, t_blk, batch, hidden):
    """One grid step == one block of T_BLK timesteps (serial recurrence)."""
    tb = pl.program_id(0)
    B, H = batch, hidden

    @pl.when(tb == 0)
    def _():
        # hc=None in the PyTorch forward -> zero initial hidden state.
        h_ref[...] = jnp.zeros_like(h_ref)

    # ---- Hoisted input projection: one GEMM for all T_BLK timesteps. ------
    x = x_ref[...].reshape(t_blk * B, x_ref.shape[-1])          # (T_BLK*B, I)
    xp = (jnp.dot(x, w_i_ref[...], preferred_element_type=jnp.float32)
          + b_i_ref[...])                                        # (T_BLK*B, 3H)

    w_h = w_h_ref[...]            # hoisted loads (no re-broadcast per step)
    b_hn = b_hn_ref[...]          # (1, H)

    # ---- Serial recurrence: one fused hidden-side matmul per step. --------
    h = h_ref[...]                                               # (B, H)
    for t in range(t_blk):        # fully unrolled; static slices only
        xp_t = xp[t * B:(t + 1) * B, :]                          # (B, 3H)
        hp = jnp.dot(h, w_h, preferred_element_type=jnp.float32) # (B, 3H)
        r = jax.nn.sigmoid(xp_t[:, 0:H] + hp[:, 0:H])
        z = jax.nn.sigmoid(xp_t[:, H:2 * H] + hp[:, H:2 * H])
        n = jnp.tanh(xp_t[:, 2 * H:] + r * (hp[:, 2 * H:] + b_hn))
        h = (1.0 - z) * n + z * h
        hs_ref[t * B:(t + 1) * B, :] = h                         # stage for out GEMM
    h_ref[...] = h                # carry across grid steps

    # ---- Hoisted output projection (nn.Linear): one GEMM per block. -------
    out = (jnp.dot(hs_ref[...], w_out_ref[...],
                   preferred_element_type=jnp.float32)
           + b_out_ref[...])                                     # (T_BLK*B, O)
    out_ref[...] = out.reshape(out_ref.shape).astype(out_ref.dtype)


def gru_linear_forward(seq, params, *, t_blk=4):
    """seq: (T, B, I) f32.  Returns (T, B, O) f32."""
    T, B, I = seq.shape
    H = params["w_h"].shape[0]
    O = params["w_out"].shape[1]

    # Pad T up to a multiple of t_blk (zero timesteps at the tail are dropped).
    pad = (-T) % t_blk
    if pad:
        seq = jnp.concatenate([seq, jnp.zeros((pad, B, I), seq.dtype)], axis=0)
    Tp = T + pad

    kernel = functools.partial(_gru_block_kernel, t_blk=t_blk, batch=B, hidden=H)

    # Constant-index weight/bias blocks. (For large H these could additionally
    # be single-buffered via pipeline_mode=pl.Buffered(1); irrelevant at H=32.)
    const = lambda shape: pl.BlockSpec(shape, lambda tb: tuple(0 for _ in shape))

    grid_spec = pltpu.PrefetchScalarGridSpec(
        num_scalar_prefetch=0,
        grid=(Tp // t_blk,),
        in_specs=[
            pl.BlockSpec((t_blk, B, I), lambda tb: (tb, 0, 0)),   # x block
            const((I, 3 * H)),                                    # w_i (fused)
            const((H, 3 * H)),                                    # w_h (fused)
            const((1, 3 * H)),                                    # b_i (fused)
            const((1, H)),                                        # b_hn
            const((H, O)),                                        # linear weight
            const((1, O)),                                        # linear bias
        ],
        out_specs=pl.BlockSpec((t_blk, B, O), lambda tb: (tb, 0, 0)),
        scratch_shapes=[
            pltpu.VMEM((B, H), jnp.float32),          # carried hidden state
            pltpu.VMEM((t_blk * B, H), jnp.float32),  # hidden-state slab per block
        ],
    )

    out = pl.pallas_call(
        kernel,
        out_shape=jax.ShapeDtypeStruct((Tp, B, O), jnp.float32),
        grid_spec=grid_spec,
        compiler_params=pltpu.CompilerParams(
            # Time recurrence is inherently serial.
            dimension_semantics=("arbitrary",)),
    )(seq, params["w_i"], params["w_h"], params["b_i"], params["b_hn"],
      params["w_out"], params["b_out"])

    return out[:T]


def init_params(key, input_size, hidden_size, output_size):
    """Deterministic init mimicking PyTorch defaults (uniform(-1/sqrt(H), 1/sqrt(H))).

    Weights stored pre-transposed/fused:
      w_i : (I, 3H) = [W_ir | W_iz | W_in]^T
      w_h : (H, 3H) = [W_hr | W_hz | W_hn]^T
      b_i : (1, 3H) = [b_ir+b_hr, b_iz+b_hz, b_in]   (b_hn kept separate: it
                                                      sits inside the r-gate)
    """
    ks = jax.random.split(key, 6)
    H = hidden_size
    lim = 1.0 / np.sqrt(H)
    u = lambda k, shape: jax.random.uniform(k, shape, jnp.float32, -lim, lim)

    w_ih = u(ks[0], (input_size, 3 * H))
    w_hh = u(ks[1], (H, 3 * H))
    b_ih = u(ks[2], (1, 3 * H))
    b_hh = u(ks[3], (1, 3 * H))

    b_i = jnp.concatenate([b_ih[:, :2 * H] + b_hh[:, :2 * H],   # fused r/z biases
                           b_ih[:, 2 * H:]],                    # input-side n bias
                          axis=1)

    return dict(
        w_i=w_ih, w_h=w_hh,
        b_i=b_i,
        b_hn=b_hh[:, 2 * H:],
        w_out=u(ks[4], (H, output_size)),
        b_out=u(ks[5], (1, output_size)),
    )


def reference_forward(seq, params):
    """Pure-JAX reference (lax.scan) matching PyTorch GRU + Linear semantics."""
    H = params["w_h"].shape[0]
    w_i, w_h = params["w_i"], params["w_h"]
    b_i, b_hn = params["b_i"][0], params["b_hn"][0]

    def step(h, x):
        xp = x @ w_i + b_i
        hp = h @ w_h
        r = jax.nn.sigmoid(xp[:, :H] + hp[:, :H])
        z = jax.nn.sigmoid(xp[:, H:2 * H] + hp[:, H:2 * H])
        n = jnp.tanh(xp[:, 2 * H:] + r * (hp[:, 2 * H:] + b_hn))
        h_new = (1.0 - z) * n + z * h
        return h_new, h_new

    B = seq.shape[1]
    h0 = jnp.zeros((B, H), jnp.float32)
    _, hs = jax.lax.scan(step, h0, seq)
    return hs @ params["w_out"] + params["b_out"][0]


if __name__ == "__main__":
    input_size, hidden_size, output_size = 8, 32, 16
    seq_len, batch = 16, 8          # batch multiple of 8 -> sublane-dense
    t_blk = 4                       # 4 timesteps per grid step

    key = jax.random.PRNGKey(0)
    k_param, k_data = jax.random.split(key)
    params = init_params(k_param, input_size, hidden_size, output_size)
    seq = jax.random.normal(k_data, (seq_len, batch, input_size), jnp.float32)

    out = gru_linear_forward(seq, params, t_blk=t_blk)
    out = jax.block_until_ready(out)

    ref = jax.block_until_ready(reference_forward(seq, params))
    np.testing.assert_allclose(np.asarray(out), np.asarray(ref),
                               rtol=1e-5, atol=1e-5)

    # TODO(synk): on v7x, additionally shard the batch across the two
    # TensorCores (leading "parallel" grid axis) and size vmem_limit_bytes
    # explicitly once H/B grow beyond toy sizes.
    print("KERNEL_OK")
</pallas_src>

<mosaic_0001>
module attributes {stable_mosaic.version = 11 : i64} {
  func.func @_gru_block_kernel(%arg0: i32, %arg1: memref<4x8x8xf32, #tpu.memory_space<vmem>>, %arg2: memref<8x96xf32, #tpu.memory_space<vmem>>, %arg3: memref<32x96xf32, #tpu.memory_space<vmem>>, %arg4: memref<1x96xf32, #tpu.memory_space<vmem>>, %arg5: memref<1x32xf32, #tpu.memory_space<vmem>>, %arg6: memref<32x16xf32, #tpu.memory_space<vmem>>, %arg7: memref<1x16xf32, #tpu.memory_space<vmem>>, %arg8: memref<4x8x16xf32, #tpu.memory_space<vmem>>, %arg9: memref<8x32xf32, #tpu.memory_space<vmem>>, %arg10: memref<32x32xf32, #tpu.memory_space<vmem>>) attributes {dimension_semantics = [#tpu.dimension_semantics<arbitrary>], iteration_bounds = array<i64: 4>, scalar_prefetch = 0 : i64, scratch_operands = 2 : i64, tpu.core_type = #tpu.core_type<tc>, window_params = [{transform_indices = @transform_0, window_bounds = array<i64: 4, 8, 8>}, {pipeline_mode = #tpu.pipeline_mode<synchronous>, transform_indices = @transform_1, window_bounds = array<i64: 8, 96>}, {pipeline_mode = #tpu.pipeline_mode<synchronous>, transform_indices = @transform_2, window_bounds = array<i64: 32, 96>}, {pipeline_mode = #tpu.pipeline_mode<synchronous>, transform_indices = @transform_3, window_bounds = array<i64: 1, 96>}, {pipeline_mode = #tpu.pipeline_mode<synchronous>, transform_indices = @transform_4, window_bounds = array<i64: 1, 32>}, {pipeline_mode = #tpu.pipeline_mode<synchronous>, transform_indices = @transform_5, window_bounds = array<i64: 32, 16>}, {pipeline_mode = #tpu.pipeline_mode<synchronous>, transform_indices = @transform_6, window_bounds = array<i64: 1, 16>}, {transform_indices = @transform_7, window_bounds = array<i64: 4, 8, 16>}]} {
    %c0_i32 = arith.constant 0 : i32
    %0 = arith.cmpi eq, %arg0, %c0_i32 : i32
    %1 = arith.extui %0 : i1 to i32
    %c0_i32_0 = arith.constant 0 : i32
    %2 = arith.cmpi ne, %1, %c0_i32_0 : i32
    scf.if %2 {
      %cst_46 = arith.constant 0.000000e+00 : f32
      %146 = vector.broadcast %cst_46 : f32 to vector<8x32xf32>
      %c0_47 = arith.constant 0 : index
      %c0_48 = arith.constant 0 : index
      %147 = vector.load %arg9[%c0_47, %c0_48] : memref<8x32xf32, #tpu.memory_space<vmem>>, vector<8x32xf32>
      tpu.vector_store %arg9[%c0_47, %c0_48], %146 {strides = array<i32>} : memref<8x32xf32, #tpu.memory_space<vmem>>, vector<8x32xf32>,
    } else {
    }
    %c0 = arith.constant 0 : index
    %c0_1 = arith.constant 0 : index
    %c0_2 = arith.constant 0 : index
    %3 = vector.load %arg1[%c0, %c0_1, %c0_2] : memref<4x8x8xf32, #tpu.memory_space<vmem>>, vector<4x8x8xf32>
    %4 = vector.shape_cast %3 : vector<4x8x8xf32> to vector<32x8xf32>
    %c0_3 = arith.constant 0 : index
    %c0_4 = arith.constant 0 : index
    %5 = vector.load %arg2[%c0_3, %c0_4] : memref<8x96xf32, #tpu.memory_space<vmem>>, vector<8x96xf32>
    %cst = arith.constant dense<0.000000e+00> : vector<32x96xf32>
    %6 = tpu.matmul %4, %5, %cst {dimension_numbers = #tpu.dot_dimension_numbers<[1], [0], [0], [1], [0, 0, 1, 1], [], []>} : vector<32x8xf32>, vector<8x96xf32>, vector<32x96xf32> -> vector<32x96xf32>
    %c0_5 = arith.constant 0 : index
    %c0_6 = arith.constant 0 : index
    %7 = vector.load %arg4[%c0_5, %c0_6] : memref<1x96xf32, #tpu.memory_space<vmem>>, vector<1x96xf32>
    %8 = vector.broadcast %7 : vector<1x96xf32> to vector<32x96xf32>
    %9 = arith.addf %6, %8 : vector<32x96xf32>
    %c0_7 = arith.constant 0 : index
    %c0_8 = arith.constant 0 : index
    %10 = vector.load %arg3[%c0_7, %c0_8] : memref<32x96xf32, #tpu.memory_space<vmem>>, vector<32x96xf32>
    %c0_9 = arith.constant 0 : index
    %c0_10 = arith.constant 0 : index
    %11 = vector.load %arg5[%c0_9, %c0_10] : memref<1x32xf32, #tpu.memory_space<vmem>>, vector<1x32xf32>
    %c0_11 = arith.constant 0 : index
    %c0_12 = arith.constant 0 : index
    %12 = vector.load %arg9[%c0_11, %c0_12] : memref<8x32xf32, #tpu.memory_space<vmem>>, vector<8x32xf32>
    %13 = vector.extract_strided_slice %9 {offsets = [0, 0], sizes = [8, 96], strides = [1, 1]} : vector<32x96xf32> to vector<8x96xf32>
    %cst_13 = arith.constant dense<0.000000e+00> : vector<8x96xf32>
    %14 = tpu.matmul %12, %10, %cst_13 {dimension_numbers = #tpu.dot_dimension_numbers<[1], [0], [0], [1], [0, 0, 1, 1], [], []>} : vector<8x32xf32>, vector<32x96xf32>, vector<8x96xf32> -> vector<8x96xf32>
    %15 = vector.extract_strided_slice %13 {offsets = [0, 0], sizes = [8, 32], strides = [1, 1]} : vector<8x96xf32> to vector<8x32xf32>
    %16 = vector.extract_strided_slice %14 {offsets = [0, 0], sizes = [8, 32], strides = [1, 1]} : vector<8x96xf32> to vector<8x32xf32>
    %17 = arith.addf %15, %16 : vector<8x32xf32>
    %18 = arith.negf %17 : vector<8x32xf32>
    %19 = math.exp %18 : vector<8x32xf32>
    %cst_14 = arith.constant 1.000000e+00 : f32
    %20 = vector.broadcast %cst_14 : f32 to vector<8x32xf32>
    %21 = arith.addf %20, %19 : vector<8x32xf32>
    %22 = arith.divf %20, %21 : vector<8x32xf32>
    %23 = vector.extract_strided_slice %13 {offsets = [0, 32], sizes = [8, 32], strides = [1, 1]} : vector<8x96xf32> to vector<8x32xf32>
    %24 = vector.extract_strided_slice %14 {offsets = [0, 32], sizes = [8, 32], strides = [1, 1]} : vector<8x96xf32> to vector<8x32xf32>
    %25 = arith.addf %23, %24 : vector<8x32xf32>
    %26 = arith.negf %25 : vector<8x32xf32>
    %27 = math.exp %26 : vector<8x32xf32>
    %cst_15 = arith.constant 1.000000e+00 : f32
    %28 = vector.broadcast %cst_15 : f32 to vector<8x32xf32>
    %29 = arith.addf %28, %27 : vector<8x32xf32>
    %30 = arith.divf %28, %29 : vector<8x32xf32>
    %31 = vector.extract_strided_slice %13 {offsets = [0, 64], sizes = [8, 32], strides = [1, 1]} : vector<8x96xf32> to vector<8x32xf32>
    %32 = vector.extract_strided_slice %14 {offsets = [0, 64], sizes = [8, 32], strides = [1, 1]} : vector<8x96xf32> to vector<8x32xf32>
    %33 = vector.broadcast %11 : vector<1x32xf32> to vector<8x32xf32>
    %34 = arith.addf %32, %33 : vector<8x32xf32>
    %35 = arith.mulf %22, %34 : vector<8x32xf32>
    %36 = arith.addf %31, %35 : vector<8x32xf32>
    %37 = math.tanh %36 : vector<8x32xf32>
    %cst_16 = arith.constant 1.000000e+00 : f32
    %38 = vector.broadcast %cst_16 : f32 to vector<8x32xf32>
    %39 = arith.subf %38, %30 : vector<8x32xf32>
    %40 = arith.mulf %39, %37 : vector<8x32xf32>
    %41 = arith.mulf %30, %12 : vector<8x32xf32>
    %42 = arith.addf %40, %41 : vector<8x32xf32>
    %c0_17 = arith.constant 0 : index
    %c0_18 = arith.constant 0 : index
    %43 = vector.load %arg10[%c0_17, %c0_18] : memref<32x32xf32, #tpu.memory_space<vmem>>, vector<8x32xf32>
    tpu.vector_store %arg10[%c0_17, %c0_18], %42 {strides = array<i32>} : memref<32x32xf32, #tpu.memory_space<vmem>>, vector<8x32xf32>,
    %44 = vector.extract_strided_slice %9 {offsets = [8, 0], sizes = [8, 96], strides = [1, 1]} : vector<32x96xf32> to vector<8x96xf32>
    %cst_19 = arith.constant dense<0.000000e+00> : vector<8x96xf32>
    %45 = tpu.matmul %42, %10, %cst_19 {dimension_numbers = #tpu.dot_dimension_numbers<[1], [0], [0], [1], [0, 0, 1, 1], [], []>} : vector<8x32xf32>, vector<32x96xf32>, vector<8x96xf32> -> vector<8x96xf32>
    %46 = vector.extract_strided_slice %44 {offsets = [0, 0], sizes = [8, 32], strides = [1, 1]} : vector<8x96xf32> to vector<8x32xf32>
    %47 = vector.extract_strided_slice %45 {offsets = [0, 0], sizes = [8, 32], strides = [1, 1]} : vector<8x96xf32> to vector<8x32xf32>
    %48 = arith.addf %46, %47 : vector<8x32xf32>
    %49 = arith.negf %48 : vector<8x32xf32>
    %50 = math.exp %49 : vector<8x32xf32>
    %cst_20 = arith.constant 1.000000e+00 : f32
    %51 = vector.broadcast %cst_20 : f32 to vector<8x32xf32>
    %52 = arith.addf %51, %50 : vector<8x32xf32>
    %53 = arith.divf %51, %52 : vector<8x32xf32>
    %54 = vector.extract_strided_slice %44 {offsets = [0, 32], sizes = [8, 32], strides = [1, 1]} : vector<8x96xf32> to vector<8x32xf32>
    %55 = vector.extract_strided_slice %45 {offsets = [0, 32], sizes = [8, 32], strides = [1, 1]} : vector<8x96xf32> to vector<8x32xf32>
    %56 = arith.addf %54, %55 : vector<8x32xf32>
    %57 = arith.negf %56 : vector<8x32xf32>
    %58 = math.exp %57 : vector<8x32xf32>
    %cst_21 = arith.constant 1.000000e+00 : f32
    %59 = vector.broadcast %cst_21 : f32 to vector<8x32xf32>
    %60 = arith.addf %59, %58 : vector<8x32xf32>
    %61 = arith.divf %59, %60 : vector<8x32xf32>
    %62 = vector.extract_strided_slice %44 {offsets = [0, 64], sizes = [8, 32], strides = [1, 1]} : vector<8x96xf32> to vector<8x32xf32>
    %63 = vector.extract_strided_slice %45 {offsets = [0, 64], sizes = [8, 32], strides = [1, 1]} : vector<8x96xf32> to vector<8x32xf32>
    %64 = vector.broadcast %11 : vector<1x32xf32> to vector<8x32xf32>
    %65 = arith.addf %63, %64 : vector<8x32xf32>
    %66 = arith.mulf %53, %65 : vector<8x32xf32>
    %67 = arith.addf %62, %66 : vector<8x32xf32>
    %68 = math.tanh %67 : vector<8x32xf32>
    %cst_22 = arith.constant 1.000000e+00 : f32
    %69 = vector.broadcast %cst_22 : f32 to vector<8x32xf32>
    %70 = arith.subf %69, %61 : vector<8x32xf32>
    %71 = arith.mulf %70, %68 : vector<8x32xf32>
    %72 = arith.mulf %61, %42 : vector<8x32xf32>
    %73 = arith.addf %71, %72 : vector<8x32xf32>
    %c8 = arith.constant 8 : index
    %c0_23 = arith.constant 0 : index
    %74 = vector.load %arg10[%c8, %c0_23] : memref<32x32xf32, #tpu.memory_space<vmem>>, vector<8x32xf32>
    tpu.vector_store %arg10[%c8, %c0_23], %73 {strides = array<i32>} : memref<32x32xf32, #tpu.memory_space<vmem>>, vector<8x32xf32>,
    %75 = vector.extract_strided_slice %9 {offsets = [16, 0], sizes = [8, 96], strides = [1, 1]} : vector<32x96xf32> to vector<8x96xf32>
    %cst_24 = arith.constant dense<0.000000e+00> : vector<8x96xf32>
    %76 = tpu.matmul %73, %10, %cst_24 {dimension_numbers = #tpu.dot_dimension_numbers<[1], [0], [0], [1], [0, 0, 1, 1], [], []>} : vector<8x32xf32>, vector<32x96xf32>, vector<8x96xf32> -> vector<8x96xf32>
    %77 = vector.extract_strided_slice %75 {offsets = [0, 0], sizes = [8, 32], strides = [1, 1]} : vector<8x96xf32> to vector<8x32xf32>
    %78 = vector.extract_strided_slice %76 {offsets = [0, 0], sizes = [8, 32], strides = [1, 1]} : vector<8x96xf32> to vector<8x32xf32>
    %79 = arith.addf %77, %78 : vector<8x32xf32>
    %80 = arith.negf %79 : vector<8x32xf32>
    %81 = math.exp %80 : vector<8x32xf32>
    %cst_25 = arith.constant 1.000000e+00 : f32
    %82 = vector.broadcast %cst_25 : f32 to vector<8x32xf32>
    %83 = arith.addf %82, %81 : vector<8x32xf32>
    %84 = arith.divf %82, %83 : vector<8x32xf32>
    %85 = vector.extract_strided_slice %75 {offsets = [0, 32], sizes = [8, 32], strides = [1, 1]} : vector<8x96xf32> to vector<8x32xf32>
    %86 = vector.extract_strided_slice %76 {offsets = [0, 32], sizes = [8, 32], strides = [1, 1]} : vector<8x96xf32> to vector<8x32xf32>
    %87 = arith.addf %85, %86 : vector<8x32xf32>
    %88 = arith.negf %87 : vector<8x32xf32>
    %89 = math.exp %88 : vector<8x32xf32>
    %cst_26 = arith.constant 1.000000e+00 : f32
    %90 = vector.broadcast %cst_26 : f32 to vector<8x32xf32>
    %91 = arith.addf %90, %89 : vector<8x32xf32>
    %92 = arith.divf %90, %91 : vector<8x32xf32>
    %93 = vector.extract_strided_slice %75 {offsets = [0, 64], sizes = [8, 32], strides = [1, 1]} : vector<8x96xf32> to vector<8x32xf32>
    %94 = vector.extract_strided_slice %76 {offsets = [0, 64], sizes = [8, 32], strides = [1, 1]} : vector<8x96xf32> to vector<8x32xf32>
    %95 = vector.broadcast %11 : vector<1x32xf32> to vector<8x32xf32>
    %96 = arith.addf %94, %95 : vector<8x32xf32>
    %97 = arith.mulf %84, %96 : vector<8x32xf32>
    %98 = arith.addf %93, %97 : vector<8x32xf32>
    %99 = math.tanh %98 : vector<8x32xf32>
    %cst_27 = arith.constant 1.000000e+00 : f32
    %100 = vector.broadcast %cst_27 : f32 to vector<8x32xf32>
    %101 = arith.subf %100, %92 : vector<8x32xf32>
    %102 = arith.mulf %101, %99 : vector<8x32xf32>
    %103 = arith.mulf %92, %73 : vector<8x32xf32>
    %104 = arith.addf %102, %103 : vector<8x32xf32>
    %c16 = arith.constant 16 : index
    %c0_28 = arith.constant 0 : index
    %105 = vector.load %arg10[%c16, %c0_28] : memref<32x32xf32, #tpu.memory_space<vmem>>, vector<8x32xf32>
    tpu.vector_store %arg10[%c16, %c0_28], %104 {strides = array<i32>} : memref<32x32xf32, #tpu.memory_space<vmem>>, vector<8x32xf32>,
    %106 = vector.extract_strided_slice %9 {offsets = [24, 0], sizes = [8, 96], strides = [1, 1]} : vector<32x96xf32> to vector<8x96xf32>
    %cst_29 = arith.constant dense<0.000000e+00> : vector<8x96xf32>
    %107 = tpu.matmul %104, %10, %cst_29 {dimension_numbers = #tpu.dot_dimension_numbers<[1], [0], [0], [1], [0, 0, 1, 1], [], []>} : vector<8x32xf32>, vector<32x96xf32>, vector<8x96xf32> -> vector<8x96xf32>
    %108 = vector.extract_strided_slice %106 {offsets = [0, 0], sizes = [8, 32], strides = [1, 1]} : vector<8x96xf32> to vector<8x32xf32>
    %109 = vector.extract_strided_slice %107 {offsets = [0, 0], sizes = [8, 32], strides = [1, 1]} : vector<8x96xf32> to vector<8x32xf32>
    %110 = arith.addf %108, %109 : vector<8x32xf32>
    %111 = arith.negf %110 : vector<8x32xf32>
    %112 = math.exp %111 : vector<8x32xf32>
    %cst_30 = arith.constant 1.000000e+00 : f32
    %113 = vector.broadcast %cst_30 : f32 to vector<8x32xf32>
    %114 = arith.addf %113, %112 : vector<8x32xf32>
    %115 = arith.divf %113, %114 : vector<8x32xf32>
    %116 = vector.extract_strided_slice %106 {offsets = [0, 32], sizes = [8, 32], strides = [1, 1]} : vector<8x96xf32> to vector<8x32xf32>
    %117 = vector.extract_strided_slice %107 {offsets = [0, 32], sizes = [8, 32], strides = [1, 1]} : vector<8x96xf32> to vector<8x32xf32>
    %118 = arith.addf %116, %117 : vector<8x32xf32>
    %119 = arith.negf %118 : vector<8x32xf32>
    %120 = math.exp %119 : vector<8x32xf32>
    %cst_31 = arith.constant 1.000000e+00 : f32
    %121 = vector.broadcast %cst_31 : f32 to vector<8x32xf32>
    %122 = arith.addf %121, %120 : vector<8x32xf32>
    %123 = arith.divf %121, %122 : vector<8x32xf32>
    %124 = vector.extract_strided_slice %106 {offsets = [0, 64], sizes = [8, 32], strides = [1, 1]} : vector<8x96xf32> to vector<8x32xf32>
    %125 = vector.extract_strided_slice %107 {offsets = [0, 64], sizes = [8, 32], strides = [1, 1]} : vector<8x96xf32> to vector<8x32xf32>
    %126 = vector.broadcast %11 : vector<1x32xf32> to vector<8x32xf32>
    %127 = arith.addf %125, %126 : vector<8x32xf32>
    %128 = arith.mulf %115, %127 : vector<8x32xf32>
    %129 = arith.addf %124, %128 : vector<8x32xf32>
    %130 = math.tanh %129 : vector<8x32xf32>
    %cst_32 = arith.constant 1.000000e+00 : f32
    %131 = vector.broadcast %cst_32 : f32 to vector<8x32xf32>
    %132 = arith.subf %131, %123 : vector<8x32xf32>
    %133 = arith.mulf %132, %130 : vector<8x32xf32>
    %134 = arith.mulf %123, %104 : vector<8x32xf32>
    %135 = arith.addf %133, %134 : vector<8x32xf32>
    %c24 = arith.constant 24 : index
    %c0_33 = arith.constant 0 : index
    %136 = vector.load %arg10[%c24, %c0_33] : memref<32x32xf32, #tpu.memory_space<vmem>>, vector<8x32xf32>
    tpu.vector_store %arg10[%c24, %c0_33], %135 {strides = array<i32>} : memref<32x32xf32, #tpu.memory_space<vmem>>, vector<8x32xf32>,
    %c0_34 = arith.constant 0 : index
    %c0_35 = arith.constant 0 : index
    %137 = vector.load %arg9[%c0_34, %c0_35] : memref<8x32xf32, #tpu.memory_space<vmem>>, vector<8x32xf32>
    tpu.vector_store %arg9[%c0_34, %c0_35], %135 {strides = array<i32>} : memref<8x32xf32, #tpu.memory_space<vmem>>, vector<8x32xf32>,
    %c0_36 = arith.constant 0 : index
    %c0_37 = arith.constant 0 : index
    %138 = vector.load %arg10[%c0_36, %c0_37] : memref<32x32xf32, #tpu.memory_space<vmem>>, vector<32x32xf32>
    %c0_38 = arith.constant 0 : index
    %c0_39 = arith.constant 0 : index
    %139 = vector.load %arg6[%c0_38, %c0_39] : memref<32x16xf32, #tpu.memory_space<vmem>>, vector<32x16xf32>
    %cst_40 = arith.constant dense<0.000000e+00> : vector<32x16xf32>
    %140 = tpu.matmul %138, %139, %cst_40 {dimension_numbers = #tpu.dot_dimension_numbers<[1], [0], [0], [1], [0, 0, 1, 1], [], []>} : vector<32x32xf32>, vector<32x16xf32>, vector<32x16xf32> -> vector<32x16xf32>
    %c0_41 = arith.constant 0 : index
    %c0_42 = arith.constant 0 : index
    %141 = vector.load %arg7[%c0_41, %c0_42] : memref<1x16xf32, #tpu.memory_space<vmem>>, vector<1x16xf32>
    %142 = vector.broadcast %141 : vector<1x16xf32> to vector<32x16xf32>
    %143 = arith.addf %140, %142 : vector<32x16xf32>
    %144 = vector.shape_cast %143 : vector<32x16xf32> to vector<4x8x16xf32>
    %c0_43 = arith.constant 0 : index
    %c0_44 = arith.constant 0 : index
    %c0_45 = arith.constant 0 : index
    %145 = vector.load %arg8[%c0_43, %c0_44, %c0_45] : memref<4x8x16xf32, #tpu.memory_space<vmem>>, vector<4x8x16xf32>
    tpu.vector_store %arg8[%c0_43, %c0_44, %c0_45], %144 {strides = array<i32>} : memref<4x8x16xf32, #tpu.memory_space<vmem>>, vector<4x8x16xf32>,
    return
  }
  func.func @transform_0(%arg0: i32) -> (i32, i32, i32) {
    %c0_i32 = arith.constant 0 : i32
    %c0_i32_0 = arith.constant 0 : i32
    %c0_i32_1 = arith.constant 0 : i32
    return %arg0, %c0_i32, %c0_i32_0 : i32, i32, i32
  }
  func.func @transform_1(%arg0: i32) -> (i32, i32) {
    %c0_i32 = arith.constant 0 : i32
    %c0_i32_0 = arith.constant 0 : i32
    %c0_i32_1 = arith.constant 0 : i32
    return %c0_i32, %c0_i32_0 : i32, i32
  }
  func.func @transform_2(%arg0: i32) -> (i32, i32) {
    %c0_i32 = arith.constant 0 : i32
    %c0_i32_0 = arith.constant 0 : i32
    %c0_i32_1 = arith.constant 0 : i32
    return %c0_i32, %c0_i32_0 : i32, i32
  }
  func.func @transform_3(%arg0: i32) -> (i32, i32) {
    %c0_i32 = arith.constant 0 : i32
    %c0_i32_0 = arith.constant 0 : i32
    %c0_i32_1 = arith.constant 0 : i32
    return %c0_i32, %c0_i32_0 : i32, i32
  }
  func.func @transform_4(%arg0: i32) -> (i32, i32) {
    %c0_i32 = arith.constant 0 : i32
    %c0_i32_0 = arith.constant 0 : i32
    %c0_i32_1 = arith.constant 0 : i32
    return %c0_i32, %c0_i32_0 : i32, i32
  }
  func.func @transform_5(%arg0: i32) -> (i32, i32) {
    %c0_i32 = arith.constant 0 : i32
    %c0_i32_0 = arith.constant 0 : i32
    %c0_i32_1 = arith.constant 0 : i32
    return %c0_i32, %c0_i32_0 : i32, i32
  }
  func.func @transform_6(%arg0: i32) -> (i32, i32) {
    %c0_i32 = arith.constant 0 : i32
    %c0_i32_0 = arith.constant 0 : i32
    %c0_i32_1 = arith.constant 0 : i32
    return %c0_i32, %c0_i32_0 : i32, i32
  }
  func.func @transform_7(%arg0: i32) -> (i32, i32, i32) {
    %c0_i32 = arith.constant 0 : i32
    %c0_i32_0 = arith.constant 0 : i32
    %c0_i32_1 = arith.constant 0 : i32
    return %arg0, %c0_i32, %c0_i32_0 : i32, i32, i32
  }
}

</mosaic_0001>

<llo_original>
// kernel: tpu_custom_call.1
$region0: #{tpu_custom_call.1}
  #allocation0 [shape = 'u32[]', space=smem, size = 0x4, offset = 0x4, fixed_abs, tag = 'smem constant byte address 0x4 - core index']
  #allocation1 [shape = 'u32[144,128]{1,0:T(1,128)}', space=vmem, size = 0x12000, scoped, tag = 'internal scratch']
  #allocation2 [shape = 'f32[8,32]{1,0:T(8,128)}', space=vmem, size = 0x1000, scoped, tag = 'scratch operand']
  #allocation3 [shape = 'f32[32,32]{1,0:T(8,128)}', space=vmem, size = 0x4000, scoped, tag = 'scratch operand']
  %s0 = inlined_call_operand.vmem [shape: f32[16,8,8], index: 0, kind: input, shape index: {}]
  %s1 = inlined_call_operand.vmem [shape: f32[8,96], index: 1, kind: input, shape index: {}]
  %s2 = inlined_call_operand.vmem [shape: f32[32,96], index: 2, kind: input, shape index: {}]
  %s3 = inlined_call_operand.vmem [shape: f32[1,96], index: 3, kind: input, shape index: {}]
  %s4 = inlined_call_operand.vmem [shape: f32[1,32], index: 4, kind: input, shape index: {}]
  %s5 = inlined_call_operand.vmem [shape: f32[32,16], index: 5, kind: input, shape index: {}]
  %s6 = inlined_call_operand.vmem [shape: f32[1,16], index: 6, kind: input, shape index: {}]
  %s7 = inlined_call_operand.hbm [shape: f32[16,8,16], index: 7, kind: output, shape index: {}]
  %s8 = sld [smem:[#allocation0]]
  $region65: #{tpu_custom_call.1} parent=0
    _
  %s10 = ssub.s32 1, %s8
  %s11 = scalar_select 0, %s10, %s8
  $region1: #{tpu_custom_call.1} parent=0
    #allocation4 [shape = 'u8[32768]{0}', space=vmem, size = 0x8000, scoped, tag = 'output window, operand 0']
    #allocation5 [shape = 's32[2]{0}', space=sflag, size = 0x8, scoped, tag = 'scoped memory for tpu_custom_call.1']
    %12 = vsyncpa [#allocation5], 0
    %s13 = scalar_lea.sflag [#allocation5], 1
    %14 = vsyncpa %s13, 0
    loop: start=0, step=1, limit=6
    $region2: #{tpu_custom_call.1} parent=1 // loop_pre_header
      _
    $region3: #{tpu_custom_call.1} parent=1 // loop_header
      %s16 = sphi 0, %s20
      %p17 = scmp.ge.s32.totalorder %s16, 6
      %s26 = sphi 0, %s28
      %s29 = sphi 0, %s26
      %s30 = sphi 0, %s29
      %s46 = sphi 0, %s30
      %s50 = sphi 0, %s50
      %s52 = sphi 0, %s50
      %s53 = sphi 0, %s52
      %s67 = sphi 0, %s53
      %s71 = sphi 0, %s71
      %s73 = sphi 0, %s71
      %s74 = sphi 0, %s73
      %s88 = sphi 0, %s74
      %s92 = sphi 0, %s92
      %s94 = sphi 0, %s92
      %s95 = sphi 0, %s94
      %s109 = sphi 0, %s95
      %s113 = sphi 0, %s113
      %s115 = sphi 0, %s113
      %s116 = sphi 0, %s115
      %s130 = sphi 0, %s116
      %s134 = sphi 0, %s134
      %s136 = sphi 0, %s134
      %s137 = sphi 0, %s136
      %s151 = sphi 0, %s137
      %s155 = sphi 0, %s155
      %s157 = sphi 0, %s155
      %s158 = sphi 0, %s157
      %s172 = sphi 0, %s158
      %s178 = sphi 0, %s180
      %s181 = sphi 0, %s178
      %s182 = sphi 0, %s181
      %s198 = sphi 0, %s182
    $region4: #{tpu_custom_call.1} parent=1 // loop_header_branch
      %19 = sbr.rel (%p17) target = $region8
    $region5: #{tpu_custom_call.1} parent=1 // loop_body
      %s21 = ssub.s32 %s16, 1
      %s22 = ssub.s32 %s16, 2
      %s23 = sadd.s32 %s16, 1
      %s24 = ssub.s32 %s16, %s23
      %p25 = scmp.eq.s32.totalorder %s24, 0
      %s27 = sadd.s32 %s26, 1
      %s28 = scalar_select %p25, %s26, %s27
      %p31 = pneg %p25
      %p32 = scmp.eq.s32.totalorder %s16, 3
      %p33 = por %p31, %p32
      %p34 = scmp.ne.s32.totalorder %s26, %s29
      %p35 = scmp.eq.s32.totalorder %s16, 0
      %p36 = por %p34, %p35
      %p37 = scmp.ne.s32.totalorder %s26, %s29
      %p38 = scmp.eq.s32.totalorder %s21, 3
      %p39 = por %p37, %p38
      %p40 = scmp.ne.s32.totalorder %s29, %s30
      %p41 = scmp.eq.s32.totalorder %s21, 0
      %p42 = por %p40, %p41
      %p43 = scmp.ne.s32.totalorder %s29, %s30
      %p44 = scmp.eq.s32.totalorder %s22, 3
      %p45 = por %p43, %p44
      %p47 = scmp.ne.s32.totalorder %s30, %s46
      %p48 = scmp.eq.s32.totalorder %s22, 0
      %p49 = por %p47, %p48
      %s51 = sadd.s32 %s50, 1
      %p54 = scmp.eq.s32.totalorder %s16, 3
      %p55 = scmp.ne.s32.totalorder %s50, %s52
      %p56 = scmp.eq.s32.totalorder %s16, 0
      %p57 = por %p55, %p56
      %p58 = scmp.ne.s32.totalorder %s50, %s52
      %p59 = scmp.eq.s32.totalorder %s21, 3
      %p60 = por %p58, %p59
      %p61 = scmp.ne.s32.totalorder %s52, %s53
      %p62 = scmp.eq.s32.totalorder %s21, 0
      %p63 = por %p61, %p62
      %p64 = scmp.ne.s32.totalorder %s52, %s53
      %p65 = scmp.eq.s32.totalorder %s22, 3
      %p66 = por %p64, %p65
      %p68 = scmp.ne.s32.totalorder %s53, %s67
      %p69 = scmp.eq.s32.totalorder %s22, 0
      %p70 = por %p68, %p69
      %s72 = sadd.s32 %s71, 1
      %p75 = scmp.eq.s32.totalorder %s16, 3
      %p76 = scmp.ne.s32.totalorder %s71, %s73
      %p77 = scmp.eq.s32.totalorder %s16, 0
      %p78 = por %p76, %p77
      %p79 = scmp.ne.s32.totalorder %s71, %s73
      %p80 = scmp.eq.s32.totalorder %s21, 3
      %p81 = por %p79, %p80
      %p82 = scmp.ne.s32.totalorder %s73, %s74
      %p83 = scmp.eq.s32.totalorder %s21, 0
      %p84 = por %p82, %p83
      %p85 = scmp.ne.s32.totalorder %s73, %s74
      %p86 = scmp.eq.s32.totalorder %s22, 3
      %p87 = por %p85, %p86
      %p89 = scmp.ne.s32.totalorder %s74, %s88
      %p90 = scmp.eq.s32.totalorder %s22, 0
      %p91 = por %p89, %p90
      %s93 = sadd.s32 %s92, 1
      %p96 = scmp.eq.s32.totalorder %s16, 3
      %p97 = scmp.ne.s32.totalorder %s92, %s94
      %p98 = scmp.eq.s32.totalorder %s16, 0
      %p99 = por %p97, %p98
      %p100 = scmp.ne.s32.totalorder %s92, %s94
      %p101 = scmp.eq.s32.totalorder %s21, 3
      %p102 = por %p100, %p101
      %p103 = scmp.ne.s32.totalorder %s94, %s95
      %p104 = scmp.eq.s32.totalorder %s21, 0
      %p105 = por %p103, %p104
      %p106 = scmp.ne.s32.totalorder %s94, %s95
      %p107 = scmp.eq.s32.totalorder %s22, 3
      %p108 = por %p106, %p107
      %p110 = scmp.ne.s32.totalorder %s95, %s109
      %p111 = scmp.eq.s32.totalorder %s22, 0
      %p112 = por %p110, %p111
      %s114 = sadd.s32 %s113, 1
      %p117 = scmp.eq.s32.totalorder %s16, 3
      %p118 = scmp.ne.s32.totalorder %s113, %s115
      %p119 = scmp.eq.s32.totalorder %s16, 0
      %p120 = por %p118, %p119
      %p121 = scmp.ne.s32.totalorder %s113, %s115
      %p122 = scmp.eq.s32.totalorder %s21, 3
      %p123 = por %p121, %p122
      %p124 = scmp.ne.s32.totalorder %s115, %s116
      %p125 = scmp.eq.s32.totalorder %s21, 0
      %p126 = por %p124, %p125
      %p127 = scmp.ne.s32.totalorder %s115, %s116
      %p128 = scmp.eq.s32.totalorder %s22, 3
      %p129 = por %p127, %p128
      %p131 = scmp.ne.s32.totalorder %s116, %s130
      %p132 = scmp.eq.s32.totalorder %s22, 0
      %p133 = por %p131, %p132
      %s135 = sadd.s32 %s134, 1
      %p138 = scmp.eq.s32.totalorder %s16, 3
      %p139 = scmp.ne.s32.totalorder %s134, %s136
      %p140 = scmp.eq.s32.totalorder %s16, 0
      %p141 = por %p139, %p140
      %p142 = scmp.ne.s32.totalorder %s134, %s136
      %p143 = scmp.eq.s32.totalorder %s21, 3
      %p144 = por %p142, %p143
      %p145 = scmp.ne.s32.totalorder %s136, %s137
      %p146 = scmp.eq.s32.totalorder %s21, 0
      %p147 = por %p145, %p146
      %p148 = scmp.ne.s32.totalorder %s136, %s137
      %p149 = scmp.eq.s32.totalorder %s22, 3
      %p150 = por %p148, %p149
      %p152 = scmp.ne.s32.totalorder %s137, %s151
      %p153 = scmp.eq.s32.totalorder %s22, 0
      %p154 = por %p152, %p153
      %s156 = sadd.s32 %s155, 1
      %p159 = scmp.eq.s32.totalorder %s16, 3
      %p160 = scmp.ne.s32.totalorder %s155, %s157
      %p161 = scmp.eq.s32.totalorder %s16, 0
      %p162 = por %p160, %p161
      %p163 = scmp.ne.s32.totalorder %s155, %s157
      %p164 = scmp.eq.s32.totalorder %s21, 3
      %p165 = por %p163, %p164
      %p166 = scmp.ne.s32.totalorder %s157, %s158
      %p167 = scmp.eq.s32.totalorder %s21, 0
      %p168 = por %p166, %p167
      %p169 = scmp.ne.s32.totalorder %s157, %s158
      %p170 = scmp.eq.s32.totalorder %s22, 3
      %p171 = por %p169, %p170
      %p173 = scmp.ne.s32.totalorder %s158, %s172
      %p174 = scmp.eq.s32.totalorder %s22, 0
      %p175 = por %p173, %p174
      %s176 = ssub.s32 %s16, %s23
      %p177 = scmp.eq.s32.totalorder %s176, 0
      %s179 = sadd.s32 %s178, 1
      %s180 = scalar_select %p177, %s178, %s179
      %p183 = pneg %p177
      %p184 = scmp.eq.s32.totalorder %s16, 3
      %p185 = por %p183, %p184
      %p186 = scmp.ne.s32.totalorder %s178, %s181
      %p187 = scmp.eq.s32.totalorder %s16, 0
      %p188 = por %p186, %p187
      %p189 = scmp.ne.s32.totalorder %s178, %s181
      %p190 = scmp.eq.s32.totalorder %s21, 3
      %p191 = por %p189, %p190
      %p192 = scmp.ne.s32.totalorder %s181, %s182
      %p193 = scmp.eq.s32.totalorder %s21, 0
      %p194 = por %p192, %p193
      %p195 = scmp.ne.s32.totalorder %s181, %s182
      %p196 = scmp.eq.s32.totalorder %s22, 3
      %p197 = por %p195, %p196
      %p199 = scmp.ne.s32.totalorder %s182, %s198
      %p200 = scmp.eq.s32.totalorder %s22, 0
      %p201 = por %p199, %p200
      %p202 = scmp.le.s32.totalorder 1, %s16
      %p203 = scmp.lt.s32.totalorder %s16, 5
      %p204 = pnand %p202, %p203
      %p205 = pneg %p204
      // Predicated region
      $region9: #{tpu_custom_call.1} parent=5 // pred_check
        _
      $region10: #{tpu_custom_call.1} parent=5 // pred_check_branch
        %207 = sbr.rel (%p204) target = $region12
      $region11: #{tpu_custom_call.1} parent=5 // pred_region
        %s208 = ssub.s32 %s16, 1
        // Predicated region
        $region13: #{tpu_custom_call.1} parent=11 // pred_check
          %p209 = pneg %p63
        $region14: #{tpu_custom_call.1} parent=11 // pred_check_branch
          %211 = sbr.rel (%p209) target = $region16
        $region15: #{tpu_custom_call.1} parent=11 // pred_region
          _
        $region16: #{tpu_custom_call.1} parent=11 // pred_fallthru
          _
        // Predicated region
        $region17: #{tpu_custom_call.1} parent=11 // pred_check
          %p212 = pneg %p84
        $region18: #{tpu_custom_call.1} parent=11 // pred_check_branch
          %214 = sbr.rel (%p212) target = $region20
        $region19: #{tpu_custom_call.1} parent=11 // pred_region
          _
        $region20: #{tpu_custom_call.1} parent=11 // pred_fallthru
          _
        // Predicated region
        $region21: #{tpu_custom_call.1} parent=11 // pred_check
          %p215 = pneg %p105
        $region22: #{tpu_custom_call.1} parent=11 // pred_check_branch
          %217 = sbr.rel (%p215) target = $region24
        $region23: #{tpu_custom_call.1} parent=11 // pred_region
          _
        $region24: #{tpu_custom_call.1} parent=11 // pred_fallthru
          _
        // Predicated region
        $region25: #{tpu_custom_call.1} parent=11 // pred_check
          %p218 = pneg %p126
        $region26: #{tpu_custom_call.1} parent=11 // pred_check_branch
          %220 = sbr.rel (%p218) target = $region28
        $region27: #{tpu_custom_call.1} parent=11 // pred_region
          _
        $region28: #{tpu_custom_call.1} parent=11 // pred_fallthru
          _
        // Predicated region
        $region29: #{tpu_custom_call.1} parent=11 // pred_check
          %p221 = pneg %p147
        $region30: #{tpu_custom_call.1} parent=11 // pred_check_branch
          %223 = sbr.rel (%p221) target = $region32
        $region31: #{tpu_custom_call.1} parent=11 // pred_region
          _
        $region32: #{tpu_custom_call.1} parent=11 // pred_fallthru
          _
        // Predicated region
        $region33: #{tpu_custom_call.1} parent=11 // pred_check
          %p224 = pneg %p168
        $region34: #{tpu_custom_call.1} parent=11 // pred_check_branch
          %226 = sbr.rel (%p224) target = $region36
        $region35: #{tpu_custom_call.1} parent=11 // pred_region
          _
        $region36: #{tpu_custom_call.1} parent=11 // pred_fallthru
          _
      $region12: #{tpu_custom_call.1} parent=5 // pred_fallthru
        _
      %p227 = scmp.lt.s32.totalorder %s16, 4
      // Predicated region
      $region37: #{tpu_custom_call.1} parent=5 // pred_check
        %p228 = pneg %p227
      $region38: #{tpu_custom_call.1} parent=5 // pred_check_branch
        %230 = sbr.rel (%p228) target = $region40
      $region39: #{tpu_custom_call.1} parent=5 // pred_region
        // Predicated region
        $region41: #{tpu_custom_call.1} parent=39 // pred_check
          %p231 = pneg %p36
        $region42: #{tpu_custom_call.1} parent=39 // pred_check_branch
          %233 = sbr.rel (%p231) target = $region44
        $region43: #{tpu_custom_call.1} parent=39 // pred_region
          %s234 = smul.u32 4, %s16
          %p235 = scmp.lt.s32.totalorder %s234, 15
          %s236 = scalar_select %p235, %s234, 15
          %s237 = smul.addr %s236, 8
          %s238 = scalar_lea.vmem %s0, %s237
          %s239 = smul.u32 4, %s16
        $region44: #{tpu_custom_call.1} parent=39 // pred_fallthru
          _
      $region40: #{tpu_custom_call.1} parent=5 // pred_fallthru
        _
      %p240 = scmp.le.s32.totalorder 1, %s16
      %p241 = scmp.lt.s32.totalorder %s16, 5
      %p242 = pnand %p240, %p241
      %p243 = pneg %p242
      // Predicated region
      $region45: #{tpu_custom_call.1} parent=5 // pred_check
        _
      $region46: #{tpu_custom_call.1} parent=5 // pred_check_branch
        %245 = sbr.rel (%p242) target = $region48
      $region47: #{tpu_custom_call.1} parent=5 // pred_region
        %s246 = ssub.s32 %s16, 1
        %s247 = smul.u32 4, %s21
        %p248 = scmp.lt.s32.totalorder %s247, 15
        %s249 = scalar_select %p248, %s247, 15
        %s250 = smul.addr %s249, 8
        %s251 = scalar_lea.vmem %s0, %s250
        %p252 = pneg %p42
        %p253 = pneg %p39
        %p254 = pneg %p63
        %p255 = pneg %p60
        %p256 = pneg %p84
        %p257 = pneg %p81
        %p258 = pneg %p105
        %p259 = pneg %p102
        %p260 = pneg %p126
        %p261 = pneg %p123
        %p262 = pneg %p147
        %p263 = pneg %p144
        %p264 = pneg %p168
        %p265 = pneg %p165
        %p266 = pneg %p194
        %p267 = pneg %p191
        %s268 = sand.u32 %s181, 1
        %s269 = scalar_lea.sflag [#allocation5], %s268
        %s270 = sand.u32 %s181, 1
        %s271 = smul.addr %s270, 32
        %s272 = scalar_lea.vmem [#allocation4], %s271
        %s273 = smul.u32 4, %s21
        %p274 = scmp.lt.s32.totalorder %s273, 15
        %s275 = scalar_select %p274, %s273, 15
        %s276 = smul.addr %s275, 8
        %s277 = scalar_lea.vmem %s0, %s276
        %s278 = smul.u32 4, %s21
        %s279 = smul.u32 4, %s21
        %p280 = scmp.eq.s32.totalorder %s21, 0
        // Predicated region
        $region49: #{tpu_custom_call.1} parent=47 // pred_check
          %p281 = pneg %p280
        $region50: #{tpu_custom_call.1} parent=47 // pred_check_branch
          %283 = sbr.rel (%p281) target = $region52
        $region51: #{tpu_custom_call.1} parent=47 // pred_region
          %vm284 = vcmask 261120
          %285 = vst.msk [vmem:[#allocation2] sm:$0xff] %vm284, 0.0
        $region52: #{tpu_custom_call.1} parent=47 // pred_fallthru
          _
        %v286 = vld [vmem:[%s277] sm:$0xff]
        %v287 = vld [vmem:[%s277 + $0x8] sm:$0xff]
        %v288 = vld [vmem:[%s277 + $0x10] sm:$0xff]
        %v289 = vld [vmem:[%s277 + $0x18] sm:$0xff]
        %v290 = vld [vmem:[%s1] sm:$0xff]
        %v291 = vld [vmem:[%s3] sm:$0x1]
        %v293 = vlaneseq
        %v294 = vshrl.u32 %v293, 7
        %v295 = vsub.s32 0, %v294
        %v296 = vrot.slane %v291, %v295
        %vm298 = vcmask 64512
        %v300 = vsel %vm298, %v286, 0
        %v303 = vsel %vm298, %v287, 0
        %v306 = vsel %vm298, %v288, 0
        %v309 = vsel %vm298, %v289, 0
        %311 = vmatprep.subr.mxu0 0.0
        %312 = vmatpush1.msra.mxu0 %v290
        %313 = vmatprep.subr.mxu0 0.0
        %314 = vmatpush1.msra.mxu0 0.0
        %315 = vmatprep.subr.mxu0 0.0
        %316 = vmatpush1.msra.mxu0 0.0
        %317 = vmatprep.subr.mxu0 0.0
        %318 = vmatpush1.msra.mxu0 0.0
        %319 = vmatprep.subr.mxu0 0.0
        %320 = vmatpush1.msra.mxu0 0.0
        %321 = vmatprep.subr.mxu0 0.0
        %322 = vmatpush1.msra.mxu0 0.0
        %323 = vmatprep.subr.mxu0 0.0
        %324 = vmatpush1.msra.mxu0 0.0
        %325 = vmatprep.subr.mxu0 0.0
        %326 = vmatpush1.msra.mxu0 0.0
        %327 = vmatprep.subr.mxu0 0.0
        %328 = vmatpush1.msra.mxu0 0.0
        %329 = vmatprep.subr.mxu0 0.0
        %330 = vmatpush1.msra.mxu0 0.0
        %331 = vmatprep.subr.mxu0 0.0
        %332 = vmatpush1.msra.mxu0 0.0
        %333 = vmatprep.subr.mxu0 0.0
        %334 = vmatpush1.msra.mxu0 0.0
        %335 = vmatprep.subr.mxu0 0.0
        %336 = vmatpush1.msra.mxu0 0.0
        %337 = vmatprep.subr.mxu0 0.0
        %338 = vmatpush1.msra.mxu0 0.0
        %339 = vmatprep.subr.mxu0 0.0
        %340 = vmatpush1.msra.mxu0 0.0
        %341 = vmatprep.subr.mxu0 0.0
        %342 = vmatpush1.msra.mxu0 0.0
        %343 = vmatprep.subr.mxu0 0.0
        %344 = vmatpush1.msra.mxu0 0.0
        %345 = vmatprep.subr.mxu0 0.0
        %346 = vmatpush1.msra.mxu0 0.0
        %347 = vmatprep.subr.mxu0 0.0
        %348 = vmatpush1.msra.mxu0 0.0
        %349 = vmatprep.subr.mxu0 0.0
        %350 = vmatpush1.msra.mxu0 0.0
        %351 = vmatprep.subr.mxu0 0.0
        %352 = vmatpush1.msra.mxu0 0.0
        %353 = vmatprep.subr.mxu0 0.0
        %354 = vmatpush1.msra.mxu0 0.0
        %355 = vmatprep.subr.mxu0 0.0
        %356 = vmatpush1.msra.mxu0 0.0
        %357 = vmatprep.subr.mxu0 0.0
        %358 = vmatpush1.msra.mxu0 0.0
        %359 = vmatprep.subr.mxu0 0.0
        %360 = vmatpush1.msra.mxu0 0.0
        %361 = vmatprep.subr.mxu0 0.0
        %362 = vmatpush1.msra.mxu0 0.0
        %363 = vmatprep.subr.mxu0 0.0
        %364 = vmatpush1.msra.mxu0 0.0
        %365 = vmatprep.subr.mxu0 0.0
        %366 = vmatpush1.msra.mxu0 0.0
        %367 = vmatprep.subr.mxu0 0.0
        %368 = vmatpush1.msra.mxu0 0.0
        %369 = vmatprep.subr.mxu0 0.0
        %370 = vmatpush1.msra.mxu0 0.0
        %371 = vmatprep.subr.mxu0 0.0
        %372 = vmatpush1.msra.mxu0 0.0
        %373 = vmatprep.subr.mxu0 0.0
        %374 = vmatpush1.msra.mxu0 0.0
        %375 = vmatprep.mubr.f32.mxu0 0.0
        %376 = vmatmul.mubr.f32.gmra.mrb[0].mxu0 %v300
        %v377 = vpop.f32.mrb[0].mxu0
        %v378 = vadd.f32 %v296, %v377
        %v379 = vpop.f32.mrb[0].mxu0
        %380 = vmatprep.mubr.f32.mxu0 0.0
        %381 = vmatmul.mubr.f32.gmra.mrb[0].mxu0 %v303
        %v382 = vpop.f32.mrb[0].mxu0
        %v383 = vadd.f32 %v296, %v382
        %v384 = vpop.f32.mrb[0].mxu0
        %385 = vmatprep.mubr.f32.mxu0 0.0
        %386 = vmatmul.mubr.f32.gmra.mrb[0].mxu0 %v306
        %v387 = vpop.f32.mrb[0].mxu0
        %v388 = vadd.f32 %v296, %v387
        %v389 = vpop.f32.mrb[0].mxu0
        %390 = vmatprep.mubr.f32.mxu0 0.0
        %391 = vmatmul.mubr.f32.gmra.mrb[0].mxu0 %v309
        %v392 = vpop.f32.mrb[0].mxu0
        %v393 = vadd.f32 %v296, %v392
        %v394 = vpop.f32.mrb[0].mxu0
        %395 = vdwg.mxu0
        %v396 = vld [vmem:[%s2] sm:$0xff]
        %v397 = vld [vmem:[%s2 + $0x8] sm:$0xff]
        %v398 = vld [vmem:[%s2 + $0x10] sm:$0xff]
        %v399 = vld [vmem:[%s2 + $0x18] sm:$0xff]
        %v400 = vld [vmem:[%s4] sm:$0x1]
        %v401 = vld [vmem:[#allocation2] sm:$0xff]
        %vm402 = vcmask 261120
        %v404 = vsel %vm402, %v401, 0
        %406 = vmatprep.subr.mxu0 0.0
        %407 = vmatpush1.msra.mxu0 %v396
        %408 = vmatprep.subr.mxu0 0.0
        %409 = vmatpush1.msra.mxu0 %v397
        %410 = vmatprep.subr.mxu0 0.0
        %411 = vmatpush1.msra.mxu0 %v398
        %412 = vmatprep.subr.mxu0 0.0
        %413 = vmatpush1.msra.mxu0 %v399
        %414 = vmatprep.subr.mxu0 0.0
        %415 = vmatpush1.msra.mxu0 0.0
        %416 = vmatprep.subr.mxu0 0.0
        %417 = vmatpush1.msra.mxu0 0.0
        %418 = vmatprep.subr.mxu0 0.0
        %419 = vmatpush1.msra.mxu0 0.0
        %420 = vmatprep.subr.mxu0 0.0
        %421 = vmatpush1.msra.mxu0 0.0
        %422 = vmatprep.subr.mxu0 0.0
        %423 = vmatpush1.msra.mxu0 0.0
        %424 = vmatprep.subr.mxu0 0.0
        %425 = vmatpush1.msra.mxu0 0.0
        %426 = vmatprep.subr.mxu0 0.0
        %427 = vmatpush1.msra.mxu0 0.0
        %428 = vmatprep.subr.mxu0 0.0
        %429 = vmatpush1.msra.mxu0 0.0
        %430 = vmatprep.subr.mxu0 0.0
        %431 = vmatpush1.msra.mxu0 0.0
        %432 = vmatprep.subr.mxu0 0.0
        %433 = vmatpush1.msra.mxu0 0.0
        %434 = vmatprep.subr.mxu0 0.0
        %435 = vmatpush1.msra.mxu0 0.0
        %436 = vmatprep.subr.mxu0 0.0
        %437 = vmatpush1.msra.mxu0 0.0
        %438 = vmatprep.subr.mxu0 0.0
        %439 = vmatpush1.msra.mxu0 0.0
        %440 = vmatprep.subr.mxu0 0.0
        %441 = vmatpush1.msra.mxu0 0.0
        %442 = vmatprep.subr.mxu0 0.0
        %443 = vmatpush1.msra.mxu0 0.0
        %444 = vmatprep.subr.mxu0 0.0
        %445 = vmatpush1.msra.mxu0 0.0
        %446 = vmatprep.subr.mxu0 0.0
        %447 = vmatpush1.msra.mxu0 0.0
        %448 = vmatprep.subr.mxu0 0.0
        %449 = vmatpush1.msra.mxu0 0.0
        %450 = vmatprep.subr.mxu0 0.0
        %451 = vmatpush1.msra.mxu0 0.0
        %452 = vmatprep.subr.mxu0 0.0
        %453 = vmatpush1.msra.mxu0 0.0
        %454 = vmatprep.subr.mxu0 0.0
        %455 = vmatpush1.msra.mxu0 0.0
        %456 = vmatprep.subr.mxu0 0.0
        %457 = vmatpush1.msra.mxu0 0.0
        %458 = vmatprep.subr.mxu0 0.0
        %459 = vmatpush1.msra.mxu0 0.0
        %460 = vmatprep.subr.mxu0 0.0
        %461 = vmatpush1.msra.mxu0 0.0
        %462 = vmatprep.subr.mxu0 0.0
        %463 = vmatpush1.msra.mxu0 0.0
        %464 = vmatprep.subr.mxu0 0.0
        %465 = vmatpush1.msra.mxu0 0.0
        %466 = vmatprep.subr.mxu0 0.0
        %467 = vmatpush1.msra.mxu0 0.0
        %468 = vmatprep.subr.mxu0 0.0
        %469 = vmatpush1.msra.mxu0 0.0
        %470 = vmatprep.mubr.f32.mxu0 0.0
        %471 = vmatmul.mubr.f32.gmra.mrb[0].mxu0 %v404
        %v472 = vpop.f32.mrb[0].mxu0
        %v473 = vadd.f32 0.0, %v472
        %v474 = vpop.f32.mrb[0].mxu0
        %475 = vdwg.mxu0
        %v476 = vadd.f32 %v378, %v473
        %v477 = vxor.u32 %v476, 2147483648
        %v478 = vmul.f32 %v477, 1.442695
        %v479 = vpow.pop %v478
        %v480 = vadd.f32 %v479, 1.0
        %v481 = vrcp.pop %v480
        %v482 = vmul.f32 1.0, %v481
        %v484 = vlaneseq
        %v485 = vshrl.u32 %v484, 7
        %v486 = vsub.s32 0, %v485
        %v487 = vrot.slane %v400, %v486
        %488 = vrot.lane.b32.xlu0 %v487, 64
        %v489 = vpop.permute.xlu0 %488
        %v491 = vadd.f32 %v473, %v489
        %493 = vrot.lane.b32.xlu0 %v491, 64
        %v494 = vpop.permute.xlu0 %493
        %v496 = vmul.f32 %v482, %v494
        %498 = vrot.lane.b32.xlu0 %v496, 64
        %v499 = vpop.permute.xlu0 %498
        %v501 = vadd.f32 %v378, %v499
        %v502 = vtanh.pop %v501
        %v503 = vsub.f32 1.0, %v482
        %505 = vrot.lane.b32.xlu0 %v502, 96
        %v506 = vpop.permute.xlu0 %505
        %v508 = vmul.f32 %v503, %v506
        %509 = vrot.lane.b32.xlu0 %v401, 32
        %v510 = vpop.permute.xlu0 %509
        %v512 = vmul.f32 %v482, %v510
        %v513 = vadd.f32 %v508, %v512
        %515 = vrot.lane.b32.xlu0 %v513, 96
        %v516 = vpop.permute.xlu0 %515
        %518 = vst.msk [vmem:[#allocation3] sm:$0xff] %vm402, %v516
        %v519 = vsel %vm402, %v516, 0
        %521 = vmatprep.subr.mxu0 0.0
        %522 = vmatpush1.msra.mxu0 %v396
        %523 = vmatprep.subr.mxu0 0.0
        %524 = vmatpush1.msra.mxu0 %v397
        %525 = vmatprep.subr.mxu0 0.0
        %526 = vmatpush1.msra.mxu0 %v398
        %527 = vmatprep.subr.mxu0 0.0
        %528 = vmatpush1.msra.mxu0 %v399
        %529 = vmatprep.subr.mxu0 0.0
        %530 = vmatpush1.msra.mxu0 0.0
        %531 = vmatprep.subr.mxu0 0.0
        %532 = vmatpush1.msra.mxu0 0.0
        %533 = vmatprep.subr.mxu0 0.0
        %534 = vmatpush1.msra.mxu0 0.0
        %535 = vmatprep.subr.mxu0 0.0
        %536 = vmatpush1.msra.mxu0 0.0
        %537 = vmatprep.subr.mxu0 0.0
        %538 = vmatpush1.msra.mxu0 0.0
        %539 = vmatprep.subr.mxu0 0.0
        %540 = vmatpush1.msra.mxu0 0.0
        %541 = vmatprep.subr.mxu0 0.0
        %542 = vmatpush1.msra.mxu0 0.0
        %543 = vmatprep.subr.mxu0 0.0
        %544 = vmatpush1.msra.mxu0 0.0
        %545 = vmatprep.subr.mxu0 0.0
        %546 = vmatpush1.msra.mxu0 0.0
        %547 = vmatprep.subr.mxu0 0.0
        %548 = vmatpush1.msra.mxu0 0.0
        %549 = vmatprep.subr.mxu0 0.0
        %550 = vmatpush1.msra.mxu0 0.0
        %551 = vmatprep.subr.mxu0 0.0
        %552 = vmatpush1.msra.mxu0 0.0
        %553 = vmatprep.subr.mxu0 0.0
        %554 = vmatpush1.msra.mxu0 0.0
        %555 = vmatprep.subr.mxu0 0.0
        %556 = vmatpush1.msra.mxu0 0.0
        %557 = vmatprep.subr.mxu0 0.0
        %558 = vmatpush1.msra.mxu0 0.0
        %559 = vmatprep.subr.mxu0 0.0
        %560 = vmatpush1.msra.mxu0 0.0
        %561 = vmatprep.subr.mxu0 0.0
        %562 = vmatpush1.msra.mxu0 0.0
        %563 = vmatprep.subr.mxu0 0.0
        %564 = vmatpush1.msra.mxu0 0.0
        %565 = vmatprep.subr.mxu0 0.0
        %566 = vmatpush1.msra.mxu0 0.0
        %567 = vmatprep.subr.mxu0 0.0
        %568 = vmatpush1.msra.mxu0 0.0
        %569 = vmatprep.subr.mxu0 0.0
        %570 = vmatpush1.msra.mxu0 0.0
        %571 = vmatprep.subr.mxu0 0.0
        %572 = vmatpush1.msra.mxu0 0.0
        %573 = vmatprep.subr.mxu0 0.0
        %574 = vmatpush1.msra.mxu0 0.0
        %575 = vmatprep.subr.mxu0 0.0
        %576 = vmatpush1.msra.mxu0 0.0
        %577 = vmatprep.subr.mxu0 0.0
        %578 = vmatpush1.msra.mxu0 0.0
        %579 = vmatprep.subr.mxu0 0.0
        %580 = vmatpush1.msra.mxu0 0.0
        %581 = vmatprep.subr.mxu0 0.0
        %582 = vmatpush1.msra.mxu0 0.0
        %583 = vmatprep.subr.mxu0 0.0
        %584 = vmatpush1.msra.mxu0 0.0
        %585 = vmatprep.mubr.f32.mxu0 0.0
        %586 = vmatmul.mubr.f32.gmra.mrb[0].mxu0 %v519
        %v587 = vpop.f32.mrb[0].mxu0
        %v588 = vadd.f32 0.0, %v587
        %v589 = vpop.f32.mrb[0].mxu0
        %590 = vdwg.mxu0
        %v591 = vadd.f32 %v383, %v588
        %v592 = vxor.u32 %v591, 2147483648
        %v593 = vmul.f32 %v592, 1.442695
        %v594 = vpow.pop %v593
        %v595 = vadd.f32 %v594, 1.0
        %v596 = vrcp.pop %v595
        %v597 = vmul.f32 1.0, %v596
        %v598 = vadd.f32 %v588, %v489
        %600 = vrot.lane.b32.xlu0 %v598, 64
        %v601 = vpop.permute.xlu0 %600
        %v603 = vmul.f32 %v597, %v601
        %605 = vrot.lane.b32.xlu0 %v603, 64
        %v606 = vpop.permute.xlu0 %605
        %v608 = vadd.f32 %v383, %v606
        %v609 = vtanh.pop %v608
        %v610 = vsub.f32 1.0, %v597
        %612 = vrot.lane.b32.xlu0 %v609, 96
        %v613 = vpop.permute.xlu0 %612
        %v615 = vmul.f32 %v610, %v613
        %v616 = vmul.f32 %v597, %v513
        %v617 = vadd.f32 %v615, %v616
        %619 = vrot.lane.b32.xlu0 %v617, 96
        %v620 = vpop.permute.xlu0 %619
        %622 = vst.msk [vmem:[#allocation3 + $0x8] sm:$0xff] %vm402, %v620
        %v623 = vsel %vm402, %v620, 0
        %625 = vmatprep.subr.mxu0 0.0
        %626 = vmatpush1.msra.mxu0 %v396
        %627 = vmatprep.subr.mxu0 0.0
        %628 = vmatpush1.msra.mxu0 %v397
        %629 = vmatprep.subr.mxu0 0.0
        %630 = vmatpush1.msra.mxu0 %v398
        %631 = vmatprep.subr.mxu0 0.0
        %632 = vmatpush1.msra.mxu0 %v399
        %633 = vmatprep.subr.mxu0 0.0
        %634 = vmatpush1.msra.mxu0 0.0
        %635 = vmatprep.subr.mxu0 0.0
        %636 = vmatpush1.msra.mxu0 0.0
        %637 = vmatprep.subr.mxu0 0.0
        %638 = vmatpush1.msra.mxu0 0.0
        %639 = vmatprep.subr.mxu0 0.0
        %640 = vmatpush1.msra.mxu0 0.0
        %641 = vmatprep.subr.mxu0 0.0
        %642 = vmatpush1.msra.mxu0 0.0
        %643 = vmatprep.subr.mxu0 0.0
        %644 = vmatpush1.msra.mxu0 0.0
        %645 = vmatprep.subr.mxu0 0.0
        %646 = vmatpush1.msra.mxu0 0.0
        %647 = vmatprep.subr.mxu0 0.0
        %648 = vmatpush1.msra.mxu0 0.0
        %649 = vmatprep.subr.mxu0 0.0
        %650 = vmatpush1.msra.mxu0 0.0
        %651 = vmatprep.subr.mxu0 0.0
        %652 = vmatpush1.msra.mxu0 0.0
        %653 = vmatprep.subr.mxu0 0.0
        %654 = vmatpush1.msra.mxu0 0.0
        %655 = vmatprep.subr.mxu0 0.0
        %656 = vmatpush1.msra.mxu0 0.0
        %657 = vmatprep.subr.mxu0 0.0
        %658 = vmatpush1.msra.mxu0 0.0
        %659 = vmatprep.subr.mxu0 0.0
        %660 = vmatpush1.msra.mxu0 0.0
        %661 = vmatprep.subr.mxu0 0.0
        %662 = vmatpush1.msra.mxu0 0.0
        %663 = vmatprep.subr.mxu0 0.0
        %664 = vmatpush1.msra.mxu0 0.0
        %665 = vmatprep.subr.mxu0 0.0
        %666 = vmatpush1.msra.mxu0 0.0
        %667 = vmatprep.subr.mxu0 0.0
        %668 = vmatpush1.msra.mxu0 0.0
        %669 = vmatprep.subr.mxu0 0.0
        %670 = vmatpush1.msra.mxu0 0.0
        %671 = vmatprep.subr.mxu0 0.0
        %672 = vmatpush1.msra.mxu0 0.0
        %673 = vmatprep.subr.mxu0 0.0
        %674 = vmatpush1.msra.mxu0 0.0
        %675 = vmatprep.subr.mxu0 0.0
        %676 = vmatpush1.msra.mxu0 0.0
        %677 = vmatprep.subr.mxu0 0.0
        %678 = vmatpush1.msra.mxu0 0.0
        %679 = vmatprep.subr.mxu0 0.0
        %680 = vmatpush1.msra.mxu0 0.0
        %681 = vmatprep.subr.mxu0 0.0
        %682 = vmatpush1.msra.mxu0 0.0
        %683 = vmatprep.subr.mxu0 0.0
        %684 = vmatpush1.msra.mxu0 0.0
        %685 = vmatprep.subr.mxu0 0.0
        %686 = vmatpush1.msra.mxu0 0.0
        %687 = vmatprep.subr.mxu0 0.0
        %688 = vmatpush1.msra.mxu0 0.0
        %689 = vmatprep.mubr.f32.mxu0 0.0
        %690 = vmatmul.mubr.f32.gmra.mrb[0].mxu0 %v623
        %v691 = vpop.f32.mrb[0].mxu0
        %v692 = vadd.f32 0.0, %v691
        %v693 = vpop.f32.mrb[0].mxu0
        %694 = vdwg.mxu0
        %v695 = vadd.f32 %v388, %v692
        %v696 = vxor.u32 %v695, 2147483648
        %v697 = vmul.f32 %v696, 1.442695
        %v698 = vpow.pop %v697
        %v699 = vadd.f32 %v698, 1.0
        %v700 = vrcp.pop %v699
        %v701 = vmul.f32 1.0, %v700
        %v702 = vadd.f32 %v692, %v489
        %704 = vrot.lane.b32.xlu0 %v702, 64
        %v705 = vpop.permute.xlu0 %704
        %v707 = vmul.f32 %v701, %v705
        %709 = vrot.lane.b32.xlu0 %v707, 64
        %v710 = vpop.permute.xlu0 %709
        %v712 = vadd.f32 %v388, %v710
        %v713 = vtanh.pop %v712
        %v714 = vsub.f32 1.0, %v701
        %716 = vrot.lane.b32.xlu0 %v713, 96
        %v717 = vpop.permute.xlu0 %716
        %v719 = vmul.f32 %v714, %v717
        %v720 = vmul.f32 %v701, %v617
        %v721 = vadd.f32 %v719, %v720
        %723 = vrot.lane.b32.xlu0 %v721, 96
        %v724 = vpop.permute.xlu0 %723
        %726 = vst.msk [vmem:[#allocation3 + $0x10] sm:$0xff] %vm402, %v724
        %v727 = vsel %vm402, %v724, 0
        %729 = vmatprep.subr.mxu0 0.0
        %730 = vmatpush1.msra.mxu0 %v396
        %731 = vmatprep.subr.mxu0 0.0
        %732 = vmatpush1.msra.mxu0 %v397
        %733 = vmatprep.subr.mxu0 0.0
        %734 = vmatpush1.msra.mxu0 %v398
        %735 = vmatprep.subr.mxu0 0.0
        %736 = vmatpush1.msra.mxu0 %v399
        %737 = vmatprep.subr.mxu0 0.0
        %738 = vmatpush1.msra.mxu0 0.0
        %739 = vmatprep.subr.mxu0 0.0
        %740 = vmatpush1.msra.mxu0 0.0
        %741 = vmatprep.subr.mxu0 0.0
        %742 = vmatpush1.msra.mxu0 0.0
        %743 = vmatprep.subr.mxu0 0.0
        %744 = vmatpush1.msra.mxu0 0.0
        %745 = vmatprep.subr.mxu0 0.0
        %746 = vmatpush1.msra.mxu0 0.0
        %747 = vmatprep.subr.mxu0 0.0
        %748 = vmatpush1.msra.mxu0 0.0
        %749 = vmatprep.subr.mxu0 0.0
        %750 = vmatpush1.msra.mxu0 0.0
        %751 = vmatprep.subr.mxu0 0.0
        %752 = vmatpush1.msra.mxu0 0.0
        %753 = vmatprep.subr.mxu0 0.0
        %754 = vmatpush1.msra.mxu0 0.0
        %755 = vmatprep.subr.mxu0 0.0
        %756 = vmatpush1.msra.mxu0 0.0
        %757 = vmatprep.subr.mxu0 0.0
        %758 = vmatpush1.msra.mxu0 0.0
        %759 = vmatprep.subr.mxu0 0.0
        %760 = vmatpush1.msra.mxu0 0.0
        %761 = vmatprep.subr.mxu0 0.0
        %762 = vmatpush1.msra.mxu0 0.0
        %763 = vmatprep.subr.mxu0 0.0
        %764 = vmatpush1.msra.mxu0 0.0
        %765 = vmatprep.subr.mxu0 0.0
        %766 = vmatpush1.msra.mxu0 0.0
        %767 = vmatprep.subr.mxu0 0.0
        %768 = vmatpush1.msra.mxu0 0.0
        %769 = vmatprep.subr.mxu0 0.0
        %770 = vmatpush1.msra.mxu0 0.0
        %771 = vmatprep.subr.mxu0 0.0
        %772 = vmatpush1.msra.mxu0 0.0
        %773 = vmatprep.subr.mxu0 0.0
        %774 = vmatpush1.msra.mxu0 0.0
        %775 = vmatprep.subr.mxu0 0.0
        %776 = vmatpush1.msra.mxu0 0.0
        %777 = vmatprep.subr.mxu0 0.0
        %778 = vmatpush1.msra.mxu0 0.0
        %779 = vmatprep.subr.mxu0 0.0
        %780 = vmatpush1.msra.mxu0 0.0
        %781 = vmatprep.subr.mxu0 0.0
        %782 = vmatpush1.msra.mxu0 0.0
        %783 = vmatprep.subr.mxu0 0.0
        %784 = vmatpush1.msra.mxu0 0.0
        %785 = vmatprep.subr.mxu0 0.0
        %786 = vmatpush1.msra.mxu0 0.0
        %787 = vmatprep.subr.mxu0 0.0
        %788 = vmatpush1.msra.mxu0 0.0
        %789 = vmatprep.subr.mxu0 0.0
        %790 = vmatpush1.msra.mxu0 0.0
        %791 = vmatprep.subr.mxu0 0.0
        %792 = vmatpush1.msra.mxu0 0.0
        %793 = vmatprep.mubr.f32.mxu0 0.0
        %794 = vmatmul.mubr.f32.gmra.mrb[0].mxu0 %v727
        %v795 = vpop.f32.mrb[0].mxu0
        %v796 = vadd.f32 0.0, %v795
        %v797 = vpop.f32.mrb[0].mxu0
        %798 = vdwg.mxu0
        %v799 = vadd.f32 %v393, %v796
        %v800 = vxor.u32 %v799, 2147483648
        %v801 = vmul.f32 %v800, 1.442695
        %v802 = vpow.pop %v801
        %v803 = vadd.f32 %v802, 1.0
        %v804 = vrcp.pop %v803
        %v805 = vmul.f32 1.0, %v804
        %v806 = vadd.f32 %v796, %v489
        %808 = vrot.lane.b32.xlu0 %v806, 64
        %v809 = vpop.permute.xlu0 %808
        %v811 = vmul.f32 %v805, %v809
        %813 = vrot.lane.b32.xlu0 %v811, 64
        %v814 = vpop.permute.xlu0 %813
        %v816 = vadd.f32 %v393, %v814
        %v817 = vtanh.pop %v816
        %v818 = vsub.f32 1.0, %v805
        %820 = vrot.lane.b32.xlu0 %v817, 96
        %v821 = vpop.permute.xlu0 %820
        %v823 = vmul.f32 %v818, %v821
        %v824 = vmul.f32 %v805, %v721
        %v825 = vadd.f32 %v823, %v824
        %827 = vrot.lane.b32.xlu0 %v825, 96
        %v828 = vpop.permute.xlu0 %827
        %830 = vst.msk [vmem:[#allocation3 + $0x18] sm:$0xff] %vm402, %v828
        %831 = vst.msk [vmem:[#allocation2] sm:$0xff] %vm402, %v828
        %v832 = vld [vmem:[#allocation3] sm:$0xff]
        %v833 = vld [vmem:[#allocation3 + $0x8] sm:$0xff]
        %v834 = vld [vmem:[#allocation3 + $0x10] sm:$0xff]
        %v835 = vld [vmem:[#allocation3 + $0x18] sm:$0xff]
        %v836 = vld [vmem:[%s5] sm:$0xff]
        %v837 = vld [vmem:[%s5 + $0x8] sm:$0xff]
        %v838 = vld [vmem:[%s5 + $0x10] sm:$0xff]
        %v839 = vld [vmem:[%s5 + $0x18] sm:$0xff]
        %v840 = vld [vmem:[%s6] sm:$0x1]
        %v842 = vlaneseq
        %v843 = vshrl.u32 %v842, 7
        %v844 = vsub.s32 0, %v843
        %v845 = vrot.slane %v840, %v844
        %v848 = vsel %vm402, %v832, 0
        %v851 = vsel %vm402, %v833, 0
        %v854 = vsel %vm402, %v834, 0
        %v857 = vsel %vm402, %v835, 0
        %859 = vmatprep.subr.mxu0 0.0
        %860 = vmatpush1.msra.mxu0 %v836
        %861 = vmatprep.subr.mxu0 0.0
        %862 = vmatpush1.msra.mxu0 %v837
        %863 = vmatprep.subr.mxu0 0.0
        %864 = vmatpush1.msra.mxu0 %v838
        %865 = vmatprep.subr.mxu0 0.0
        %866 = vmatpush1.msra.mxu0 %v839
        %867 = vmatprep.subr.mxu0 0.0
        %868 = vmatpush1.msra.mxu0 0.0
        %869 = vmatprep.subr.mxu0 0.0
        %870 = vmatpush1.msra.mxu0 0.0
        %871 = vmatprep.subr.mxu0 0.0
        %872 = vmatpush1.msra.mxu0 0.0
        %873 = vmatprep.subr.mxu0 0.0
        %874 = vmatpush1.msra.mxu0 0.0
        %875 = vmatprep.subr.mxu0 0.0
        %876 = vmatpush1.msra.mxu0 0.0
        %877 = vmatprep.subr.mxu0 0.0
        %878 = vmatpush1.msra.mxu0 0.0
        %879 = vmatprep.subr.mxu0 0.0
        %880 = vmatpush1.msra.mxu0 0.0
        %881 = vmatprep.subr.mxu0 0.0
        %882 = vmatpush1.msra.mxu0 0.0
        %883 = vmatprep.subr.mxu0 0.0
        %884 = vmatpush1.msra.mxu0 0.0
        %885 = vmatprep.subr.mxu0 0.0
        %886 = vmatpush1.msra.mxu0 0.0
        %887 = vmatprep.subr.mxu0 0.0
        %888 = vmatpush1.msra.mxu0 0.0
        %889 = vmatprep.subr.mxu0 0.0
        %890 = vmatpush1.msra.mxu0 0.0
        %891 = vmatprep.subr.mxu0 0.0
        %892 = vmatpush1.msra.mxu0 0.0
        %893 = vmatprep.subr.mxu0 0.0
        %894 = vmatpush1.msra.mxu0 0.0
        %895 = vmatprep.subr.mxu0 0.0
        %896 = vmatpush1.msra.mxu0 0.0
        %897 = vmatprep.subr.mxu0 0.0
        %898 = vmatpush1.msra.mxu0 0.0
        %899 = vmatprep.subr.mxu0 0.0
        %900 = vmatpush1.msra.mxu0 0.0
        %901 = vmatprep.subr.mxu0 0.0
        %902 = vmatpush1.msra.mxu0 0.0
        %903 = vmatprep.subr.mxu0 0.0
        %904 = vmatpush1.msra.mxu0 0.0
        %905 = vmatprep.subr.mxu0 0.0
        %906 = vmatpush1.msra.mxu0 0.0
        %907 = vmatprep.subr.mxu0 0.0
        %908 = vmatpush1.msra.mxu0 0.0
        %909 = vmatprep.subr.mxu0 0.0
        %910 = vmatpush1.msra.mxu0 0.0
        %911 = vmatprep.subr.mxu0 0.0
        %912 = vmatpush1.msra.mxu0 0.0
        %913 = vmatprep.subr.mxu0 0.0
        %914 = vmatpush1.msra.mxu0 0.0
        %915 = vmatprep.subr.mxu0 0.0
        %916 = vmatpush1.msra.mxu0 0.0
        %917 = vmatprep.subr.mxu0 0.0
        %918 = vmatpush1.msra.mxu0 0.0
        %919 = vmatprep.subr.mxu0 0.0
        %920 = vmatpush1.msra.mxu0 0.0
        %921 = vmatprep.subr.mxu0 0.0
        %922 = vmatpush1.msra.mxu0 0.0
        %923 = vmatprep.mubr.f32.mxu0 0.0
        %924 = vmatmul.mubr.f32.gmra.mrb[0].mxu0 %v848
        %v925 = vpop.f32.mrb[0].mxu0
        %v926 = vadd.f32 %v845, %v925
        %v927 = vpop.f32.mrb[0].mxu0
        %928 = vmatprep.mubr.f32.mxu0 0.0
        %929 = vmatmul.mubr.f32.gmra.mrb[0].mxu0 %v851
        %v930 = vpop.f32.mrb[0].mxu0
        %v931 = vadd.f32 %v845, %v930
        %v932 = vpop.f32.mrb[0].mxu0
        %933 = vmatprep.mubr.f32.mxu0 0.0
        %934 = vmatmul.mubr.f32.gmra.mrb[0].mxu0 %v854
        %v935 = vpop.f32.mrb[0].mxu0
        %v936 = vadd.f32 %v845, %v935
        %v937 = vpop.f32.mrb[0].mxu0
        %938 = vmatprep.mubr.f32.mxu0 0.0
        %939 = vmatmul.mubr.f32.gmra.mrb[0].mxu0 %v857
        %v940 = vpop.f32.mrb[0].mxu0
        %v941 = vadd.f32 %v845, %v940
        %v942 = vpop.f32.mrb[0].mxu0
        %943 = vdwg.mxu0
        %vm944 = vcmask 130048
        %945 = vst.msk [vmem:[%s272] sm:$0xff] %vm944, %v926
        %946 = vst.msk [vmem:[%s272 + $0x8] sm:$0xff] %vm944, %v931
        %947 = vst.msk [vmem:[%s272 + $0x10] sm:$0xff] %vm944, %v936
        %948 = vst.msk [vmem:[%s272 + $0x18] sm:$0xff] %vm944, %v941
        %s949 = sand.u32 %s181, 1
        %s950 = scalar_lea.sflag [#allocation5], %s949
        %s951 = sand.u32 %s181, 1
        %s952 = smul.addr %s951, 32
        %s953 = scalar_lea.vmem [#allocation4], %s952
        // Predicated region
        $region53: #{tpu_custom_call.1} parent=47 // pred_check
          %p954 = pneg %p191
        $region54: #{tpu_custom_call.1} parent=47 // pred_check_branch
          %956 = sbr.rel (%p954) target = $region56
        $region55: #{tpu_custom_call.1} parent=47 // pred_region
          %s957 = smul.u32 4, %s21
          %s959 = ssub.s32 512, 512
          %960 = vsyncadd %s950, %s959
          %s961 = smul.addr %s957, 128
          %s962 = scalar_lea.hbm %s7, %s961
          %s963 = sshll.u32 %s953, 4
          %s964 = int_to_ptr.vmem [resolvable:$true] %s963
          %969 = dma.vmem_to_hbm [thread:$0]  %s964, 512, %s962, %s950, 128, 128, 8
        $region56: #{tpu_custom_call.1} parent=47 // pred_fallthru
          _
      $region48: #{tpu_custom_call.1} parent=5 // pred_fallthru
        _
      %p970 = scmp.le.s32.totalorder 2, %s16
      // Predicated region
      $region57: #{tpu_custom_call.1} parent=5 // pred_check
        %p971 = pneg %p970
      $region58: #{tpu_custom_call.1} parent=5 // pred_check_branch
        %973 = sbr.rel (%p971) target = $region60
      $region59: #{tpu_custom_call.1} parent=5 // pred_region
        %s974 = ssub.s32 %s16, 2
        // Predicated region
        $region61: #{tpu_custom_call.1} parent=59 // pred_check
          %p975 = pneg %p197
        $region62: #{tpu_custom_call.1} parent=59 // pred_check_branch
          %977 = sbr.rel (%p975) target = $region64
        $region63: #{tpu_custom_call.1} parent=59 // pred_region
          %s978 = sand.u32 %s182, 1
          %s979 = scalar_lea.sflag [#allocation5], %s978
          %s980 = sand.u32 %s182, 1
          %s981 = smul.addr %s980, 32
          %s982 = scalar_lea.vmem [#allocation4], %s981
          %983 = dma.done %s979, 512
        $region64: #{tpu_custom_call.1} parent=59 // pred_fallthru
          _
      $region60: #{tpu_custom_call.1} parent=5 // pred_fallthru
        _
    $region6: #{tpu_custom_call.1} parent=1 // loop_footer
      %s20 = sadd.s32 1, %s16
    $region7: #{tpu_custom_call.1} parent=1 // loop_footer_branch
      %15 = sbr.rel target = $region3
    $region8: #{tpu_custom_call.1} parent=1 // loop_exit
      _
    %984 = vsyncpa [#allocation5], 1
    %s985 = scalar_lea.sflag [#allocation5], 1
    %986 = vsyncpa %s985, 1

</llo_original>
